<compile_context>
chip_gen: v6e
topology: v6e:2x2x1
jax: 0.10.0
libtpu: 0.0.40
codegen_flags: <defaults>
</compile_context>

<pallas_src>
import functools

import jax
import jax.numpy as jnp
from jax.experimental import pallas as pl
from jax.experimental.pallas import tpu as pltpu


# ----------------------------------------------------------------------------
# Helpers
# ----------------------------------------------------------------------------
def _round_up(x, m):
    return (x + m - 1) // m * m


def _cdiv(a, b):
    return (a + b - 1) // b


# ----------------------------------------------------------------------------
# Fused kernel: whole MinGRU stack + final Linear on one activation tile
# ----------------------------------------------------------------------------
def make_fused_stack_kernel(nlayers, hidden_pad):
    """Kernel ref order:
         x_ref,                                (tm, D_in)
         [w_l, b_l] * nlayers,                 (K_l, 2*Hp), (1, 2*Hp)
         wf, bf,                               (Hp, Op),    (1, Op)
         o_ref                                 (tm, Op)
    """

    def kernel(x_ref, *refs):
        o_ref = refs[-1]
        p_refs = refs[:-1]

        act = x_ref[...]                      # matmul operand dtype (bf16/f32)
        idx = 0
        for _ in range(nlayers):
            w = p_refs[idx][...]              # (K, 2*Hp), columns [Wz | Wh]
            b = p_refs[idx + 1][...]          # (1, 2*Hp), f32
            idx += 2
            # One MXU matmul per layer; f32 accumulation + f32 elementwise.
            zh = jnp.dot(act, w, preferred_element_type=jnp.float32) + b
            z = jax.nn.sigmoid(zh[:, :hidden_pad])     # 128-aligned split
            h = zh[:, hidden_pad:]
            act = (z * h).astype(w.dtype)     # back to operand dtype

        wf = p_refs[idx][...]                 # (Hp, Op)
        bf = p_refs[idx + 1][...]             # (1, Op), f32
        y = jnp.dot(act, wf, preferred_element_type=jnp.float32) + bf
        o_ref[...] = y.astype(o_ref.dtype)    # write directly in final dtype

    return kernel


# ----------------------------------------------------------------------------
# Tiling / VMEM-budget helpers
# ----------------------------------------------------------------------------
def _choose_tiles(M, tm_max):
    """Large tiles to amortize per-step overhead; once there is enough work,
    force an even number of grid steps so v7x's 2 TensorCores balance."""
    n_tiles = _cdiv(M, tm_max)
    if M > 256:                       # enough rows to be worth splitting
        n_tiles = max(n_tiles, 2)
        if n_tiles % 2:
            n_tiles += 1
    tm = _round_up(_cdiv(M, n_tiles), 16)   # 16: bf16 sublane-pack friendly
    m_pad = _round_up(M, tm)
    return tm, m_pad, m_pad // tm


def _vmem_limit_bytes(tm, d_in, packed, out_pad, x_itemsize, out_itemsize):
    hp2 = packed[0].shape[1]                        # 2 * hidden_pad
    need = 2 * tm * d_in * x_itemsize               # double-buffered x tile
    need += 2 * tm * out_pad * out_itemsize         # double-buffered out tile
    need += sum(int(a.size) * a.dtype.itemsize for a in packed)  # 1-buffered
    need += 6 * tm * hp2 * 4                        # f32 intermediates + slack
    # 2x headroom for Mosaic internal scratch; stay well below v7x's 64 MiB.
    return int(min(48 * 1024 * 1024, max(4 * 1024 * 1024, 2 * need)))


# ----------------------------------------------------------------------------
# Fused forward (jit fuses the wrapper-side reshape/cast/tail-pad chain)
# ----------------------------------------------------------------------------
@functools.partial(
    jax.jit, static_argnames=("output_size", "matmul_dtype", "tm_max"))
def _forward_impl(x, packed, *, output_size, matmul_dtype, tm_max):
    """x: (B, S, D).  packed: tuple (w0,b0, ..., wf,bf) of packed weights."""
    B, S, D = x.shape
    out_dtype = x.dtype
    M = B * S

    nlayers = (len(packed) - 2) // 2
    hidden_pad = packed[0].shape[1] // 2
    out_pad = packed[-2].shape[1]

    tm, m_pad, grid_n = _choose_tiles(M, tm_max)

    # reshape -> cast -> (optional tail zero-pad): one fused producer under jit.
    x2d = x.reshape(M, D).astype(matmul_dtype)
    if m_pad != M:
        x2d = jnp.pad(x2d, ((0, m_pad - M), (0, 0)))

    in_specs = [pl.BlockSpec((tm, D), lambda i: (i, 0))]
    for arr in packed:
        # Grid-invariant -> VMEM-resident; single buffer (no 2x weight VMEM).
        in_specs.append(
            pl.BlockSpec(arr.shape, lambda i: (0, 0),
                         pipeline_mode=pl.Buffered(1)))

    vmem_limit = _vmem_limit_bytes(
        tm, D, packed, out_pad,
        jnp.dtype(matmul_dtype).itemsize, jnp.dtype(out_dtype).itemsize)

    out = pl.pallas_call(
        make_fused_stack_kernel(nlayers, hidden_pad),
        out_shape=jax.ShapeDtypeStruct((m_pad, out_pad), out_dtype),
        grid_spec=pltpu.PrefetchScalarGridSpec(
            num_scalar_prefetch=0,
            grid=(grid_n,),
            in_specs=in_specs,
            out_specs=pl.BlockSpec((tm, out_pad), lambda i: (i, 0)),
        ),
        compiler_params=pltpu.CompilerParams(
            dimension_semantics=("parallel",),
            vmem_limit_bytes=vmem_limit,
        ),
    )(x2d, *packed)

    return out[:M, :output_size].reshape(B, S, output_size)


# ----------------------------------------------------------------------------
# Parameter construction (deterministic, PyTorch nn.Linear-style uniform init)
# ----------------------------------------------------------------------------
def make_linear_params(key, in_features, out_features, dtype=jnp.float32):
    kw, kb = jax.random.split(key)
    bound = 1.0 / jnp.sqrt(jnp.array(in_features, dtype))
    w = jax.random.uniform(kw, (out_features, in_features), dtype, -bound, bound)
    b = jax.random.uniform(kb, (out_features,), dtype, -bound, bound)
    return w, b


def make_mingrustack_params(key, nlayers, input_size, hidden_size, output_size):
    params = []
    sizes = [(input_size, hidden_size)] + [(hidden_size, hidden_size)] * (nlayers - 1)
    for (din, dout) in sizes:
        key, kh, kz = jax.random.split(key, 3)
        wh, bh = make_linear_params(kh, din, dout)
        wz, bz = make_linear_params(kz, din, dout)
        params.append(("mingru", wh, bh, wz, bz))
    key, kf = jax.random.split(key)
    wf, bf = make_linear_params(kf, hidden_size, output_size)
    params.append(("linear", wf, bf))
    return params


# ----------------------------------------------------------------------------
# Packing: transpose to (in, out), pad N to 128 multiples, concat [Wz | Wh].
# Layer 0 keeps K = input_size unpadded (x is streamed unpadded from HBM);
# layers >= 1 pad K to hidden_pad because the previous layer emits Hp columns.
# ----------------------------------------------------------------------------
def pack_mingrustack_params(params, matmul_dtype=jnp.bfloat16):
    hidden_size = params[0][1].shape[0]
    output_size = params[-1][1].shape[0]
    hp = _round_up(hidden_size, 128)
    op = _round_up(output_size, 128)

    packed = []
    for li, layer in enumerate(params[:-1]):
        _, wh, bh, wz, bz = layer
        din = wh.shape[1]
        kp = din if li == 0 else _round_up(din, 128)
        wz_t = jnp.pad(wz.T, ((0, kp - din), (0, hp - hidden_size)))
        wh_t = jnp.pad(wh.T, ((0, kp - din), (0, hp - hidden_size)))
        w = jnp.concatenate([wz_t, wh_t], axis=1).astype(matmul_dtype)  # (kp, 2*hp)
        b = jnp.concatenate(
            [jnp.pad(bz, (0, hp - hidden_size)), jnp.pad(bh, (0, hp - hidden_size))]
        ).reshape(1, 2 * hp).astype(jnp.float32)
        packed += [w, b]

    _, wf, bf = params[-1]
    wf_t = jnp.pad(wf.T, ((0, hp - hidden_size), (0, op - output_size))).astype(matmul_dtype)
    bf_p = jnp.pad(bf, (0, op - output_size)).reshape(1, op).astype(jnp.float32)
    packed += [wf_t, bf_p]
    return tuple(packed)


def mingrustack_forward(params, x, *, matmul_dtype=jnp.bfloat16, tm_max=1024):
    """x: [batch, seq, input_size] -> [batch, seq, output_size] (x.dtype)."""
    output_size = params[-1][1].shape[0]
    packed = pack_mingrustack_params(params, matmul_dtype=matmul_dtype)
    return _forward_impl(x, packed, output_size=output_size,
                         matmul_dtype=matmul_dtype, tm_max=tm_max)


# ----------------------------------------------------------------------------
# Reference (pure JAX) for sanity check
# ----------------------------------------------------------------------------
def mingrustack_ref(params, x):
    B, S, D = x.shape
    out = x.reshape(B * S, D)
    for layer in params:
        if layer[0] == "mingru":
            _, wh, bh, wz, bz = layer
            z = jax.nn.sigmoid(out @ wz.T + bz)
            h = out @ wh.T + bh
            out = z * h
        else:
            _, wf, bf = layer
            out = out @ wf.T + bf
    return out.reshape(B, S, -1)


if __name__ == "__main__":
    # Small shapes consistent with the module's forward.
    nlayers, input_size, hidden_size, output_size = 3, 32, 32, 16
    batch, seq = 2, 8

    key = jax.random.PRNGKey(0)
    kx, kp = jax.random.split(key)
    x = jax.random.normal(kx, (batch, seq, input_size), jnp.float32)
    params = make_mingrustack_params(kp, nlayers, input_size, hidden_size, output_size)
    ref = mingrustack_ref(params, x)

    # 1) Exact-precision path (f32 matmul operands) -> tight tolerance.
    out_f32 = jax.block_until_ready(
        mingrustack_forward(params, x, matmul_dtype=jnp.float32))
    assert out_f32.shape == (batch, seq, output_size), out_f32.shape
    assert jnp.allclose(out_f32, ref, atol=1e-5, rtol=1e-5), \
        float(jnp.max(jnp.abs(out_f32 - ref)))

    # 2) Default fast path (bf16 matmul operands, f32 accumulation).
    out_bf16 = jax.block_until_ready(mingrustack_forward(params, x))
    assert out_bf16.shape == (batch, seq, output_size), out_bf16.shape
    assert jnp.allclose(out_bf16, ref, atol=5e-2, rtol=5e-2), \
        float(jnp.max(jnp.abs(out_bf16 - ref)))

    # 3) Larger M exercising the multi-tile grid (M=1200 -> 2 balanced tiles
    #    of 608 rows, tail zero-padded; both v7x cores get one tile).
    x2 = jax.random.normal(jax.random.PRNGKey(1), (4, 300, input_size), jnp.float32)
    ref2 = mingrustack_ref(params, x2)
    out2 = jax.block_until_ready(
        mingrustack_forward(params, x2, matmul_dtype=jnp.float32))
    assert out2.shape == (4, 300, output_size), out2.shape
    assert jnp.allclose(out2, ref2, atol=1e-5, rtol=1e-5), \
        float(jnp.max(jnp.abs(out2 - ref2)))

    print("KERNEL_OK")
</pallas_src>

<mosaic_0001>
module attributes {stable_mosaic.version = 11 : i64} {
  func.func @kernel(%arg0: i32, %arg1: memref<16x32xf32, #tpu.memory_space<vmem>>, %arg2: memref<32x256xf32, #tpu.memory_space<vmem>>, %arg3: memref<1x256xf32, #tpu.memory_space<vmem>>, %arg4: memref<128x256xf32, #tpu.memory_space<vmem>>, %arg5: memref<1x256xf32, #tpu.memory_space<vmem>>, %arg6: memref<128x256xf32, #tpu.memory_space<vmem>>, %arg7: memref<1x256xf32, #tpu.memory_space<vmem>>, %arg8: memref<128x128xf32, #tpu.memory_space<vmem>>, %arg9: memref<1x128xf32, #tpu.memory_space<vmem>>, %arg10: memref<16x128xf32, #tpu.memory_space<vmem>>) attributes {dimension_semantics = [#tpu.dimension_semantics<parallel>], iteration_bounds = array<i64: 1>, scalar_prefetch = 0 : i64, scratch_operands = 0 : i64, tpu.core_type = #tpu.core_type<tc>, window_params = [{transform_indices = @transform_0, window_bounds = array<i64: 16, 32>}, {pipeline_mode = #tpu.pipeline_mode<synchronous>, transform_indices = @transform_1, window_bounds = array<i64: 32, 256>}, {pipeline_mode = #tpu.pipeline_mode<synchronous>, transform_indices = @transform_2, window_bounds = array<i64: 1, 256>}, {pipeline_mode = #tpu.pipeline_mode<synchronous>, transform_indices = @transform_3, window_bounds = array<i64: 128, 256>}, {pipeline_mode = #tpu.pipeline_mode<synchronous>, transform_indices = @transform_4, window_bounds = array<i64: 1, 256>}, {pipeline_mode = #tpu.pipeline_mode<synchronous>, transform_indices = @transform_5, window_bounds = array<i64: 128, 256>}, {pipeline_mode = #tpu.pipeline_mode<synchronous>, transform_indices = @transform_6, window_bounds = array<i64: 1, 256>}, {pipeline_mode = #tpu.pipeline_mode<synchronous>, transform_indices = @transform_7, window_bounds = array<i64: 128, 128>}, {pipeline_mode = #tpu.pipeline_mode<synchronous>, transform_indices = @transform_8, window_bounds = array<i64: 1, 128>}, {transform_indices = @transform_9, window_bounds = array<i64: 16, 128>}]} {
    %c0 = arith.constant 0 : index
    %c0_0 = arith.constant 0 : index
    %0 = vector.load %arg1[%c0, %c0_0] : memref<16x32xf32, #tpu.memory_space<vmem>>, vector<16x32xf32>
    %c0_1 = arith.constant 0 : index
    %c0_2 = arith.constant 0 : index
    %1 = vector.load %arg2[%c0_1, %c0_2] : memref<32x256xf32, #tpu.memory_space<vmem>>, vector<32x256xf32>
    %c0_3 = arith.constant 0 : index
    %c0_4 = arith.constant 0 : index
    %2 = vector.load %arg3[%c0_3, %c0_4] : memref<1x256xf32, #tpu.memory_space<vmem>>, vector<1x256xf32>
    %cst = arith.constant dense<0.000000e+00> : vector<16x256xf32>
    %3 = tpu.matmul %0, %1, %cst {dimension_numbers = #tpu.dot_dimension_numbers<[1], [0], [0], [1], [0, 0, 1, 1], [], []>} : vector<16x32xf32>, vector<32x256xf32>, vector<16x256xf32> -> vector<16x256xf32>
    %4 = vector.broadcast %2 : vector<1x256xf32> to vector<16x256xf32>
    %5 = arith.addf %3, %4 : vector<16x256xf32>
    %6 = vector.extract_strided_slice %5 {offsets = [0, 0], sizes = [16, 128], strides = [1, 1]} : vector<16x256xf32> to vector<16x128xf32>
    %7 = arith.negf %6 : vector<16x128xf32>
    %8 = math.exp %7 : vector<16x128xf32>
    %cst_5 = arith.constant 1.000000e+00 : f32
    %9 = vector.broadcast %cst_5 : f32 to vector<16x128xf32>
    %10 = arith.addf %9, %8 : vector<16x128xf32>
    %11 = arith.divf %9, %10 : vector<16x128xf32>
    %12 = vector.extract_strided_slice %5 {offsets = [0, 128], sizes = [16, 128], strides = [1, 1]} : vector<16x256xf32> to vector<16x128xf32>
    %13 = arith.mulf %11, %12 : vector<16x128xf32>
    %c0_6 = arith.constant 0 : index
    %c0_7 = arith.constant 0 : index
    %14 = vector.load %arg4[%c0_6, %c0_7] : memref<128x256xf32, #tpu.memory_space<vmem>>, vector<128x256xf32>
    %c0_8 = arith.constant 0 : index
    %c0_9 = arith.constant 0 : index
    %15 = vector.load %arg5[%c0_8, %c0_9] : memref<1x256xf32, #tpu.memory_space<vmem>>, vector<1x256xf32>
    %cst_10 = arith.constant dense<0.000000e+00> : vector<16x256xf32>
    %16 = tpu.matmul %13, %14, %cst_10 {dimension_numbers = #tpu.dot_dimension_numbers<[1], [0], [0], [1], [0, 0, 1, 1], [], []>} : vector<16x128xf32>, vector<128x256xf32>, vector<16x256xf32> -> vector<16x256xf32>
    %17 = vector.broadcast %15 : vector<1x256xf32> to vector<16x256xf32>
    %18 = arith.addf %16, %17 : vector<16x256xf32>
    %19 = vector.extract_strided_slice %18 {offsets = [0, 0], sizes = [16, 128], strides = [1, 1]} : vector<16x256xf32> to vector<16x128xf32>
    %20 = arith.negf %19 : vector<16x128xf32>
    %21 = math.exp %20 : vector<16x128xf32>
    %cst_11 = arith.constant 1.000000e+00 : f32
    %22 = vector.broadcast %cst_11 : f32 to vector<16x128xf32>
    %23 = arith.addf %22, %21 : vector<16x128xf32>
    %24 = arith.divf %22, %23 : vector<16x128xf32>
    %25 = vector.extract_strided_slice %18 {offsets = [0, 128], sizes = [16, 128], strides = [1, 1]} : vector<16x256xf32> to vector<16x128xf32>
    %26 = arith.mulf %24, %25 : vector<16x128xf32>
    %c0_12 = arith.constant 0 : index
    %c0_13 = arith.constant 0 : index
    %27 = vector.load %arg6[%c0_12, %c0_13] : memref<128x256xf32, #tpu.memory_space<vmem>>, vector<128x256xf32>
    %c0_14 = arith.constant 0 : index
    %c0_15 = arith.constant 0 : index
    %28 = vector.load %arg7[%c0_14, %c0_15] : memref<1x256xf32, #tpu.memory_space<vmem>>, vector<1x256xf32>
    %cst_16 = arith.constant dense<0.000000e+00> : vector<16x256xf32>
    %29 = tpu.matmul %26, %27, %cst_16 {dimension_numbers = #tpu.dot_dimension_numbers<[1], [0], [0], [1], [0, 0, 1, 1], [], []>} : vector<16x128xf32>, vector<128x256xf32>, vector<16x256xf32> -> vector<16x256xf32>
    %30 = vector.broadcast %28 : vector<1x256xf32> to vector<16x256xf32>
    %31 = arith.addf %29, %30 : vector<16x256xf32>
    %32 = vector.extract_strided_slice %31 {offsets = [0, 0], sizes = [16, 128], strides = [1, 1]} : vector<16x256xf32> to vector<16x128xf32>
    %33 = arith.negf %32 : vector<16x128xf32>
    %34 = math.exp %33 : vector<16x128xf32>
    %cst_17 = arith.constant 1.000000e+00 : f32
    %35 = vector.broadcast %cst_17 : f32 to vector<16x128xf32>
    %36 = arith.addf %35, %34 : vector<16x128xf32>
    %37 = arith.divf %35, %36 : vector<16x128xf32>
    %38 = vector.extract_strided_slice %31 {offsets = [0, 128], sizes = [16, 128], strides = [1, 1]} : vector<16x256xf32> to vector<16x128xf32>
    %39 = arith.mulf %37, %38 : vector<16x128xf32>
    %c0_18 = arith.constant 0 : index
    %c0_19 = arith.constant 0 : index
    %40 = vector.load %arg8[%c0_18, %c0_19] : memref<128x128xf32, #tpu.memory_space<vmem>>, vector<128x128xf32>
    %c0_20 = arith.constant 0 : index
    %c0_21 = arith.constant 0 : index
    %41 = vector.load %arg9[%c0_20, %c0_21] : memref<1x128xf32, #tpu.memory_space<vmem>>, vector<1x128xf32>
    %cst_22 = arith.constant dense<0.000000e+00> : vector<16x128xf32>
    %42 = tpu.matmul %39, %40, %cst_22 {dimension_numbers = #tpu.dot_dimension_numbers<[1], [0], [0], [1], [0, 0, 1, 1], [], []>} : vector<16x128xf32>, vector<128x128xf32>, vector<16x128xf32> -> vector<16x128xf32>
    %43 = vector.broadcast %41 : vector<1x128xf32> to vector<16x128xf32>
    %44 = arith.addf %42, %43 : vector<16x128xf32>
    %c0_23 = arith.constant 0 : index
    %c0_24 = arith.constant 0 : index
    %45 = vector.load %arg10[%c0_23, %c0_24] : memref<16x128xf32, #tpu.memory_space<vmem>>, vector<16x128xf32>
    tpu.vector_store %arg10[%c0_23, %c0_24], %44 {strides = array<i32>} : memref<16x128xf32, #tpu.memory_space<vmem>>, vector<16x128xf32>,
    return
  }
  func.func @transform_0(%arg0: i32) -> (i32, i32) {
    %c0_i32 = arith.constant 0 : i32
    %c0_i32_0 = arith.constant 0 : i32
    return %arg0, %c0_i32 : i32, i32
  }
  func.func @transform_1(%arg0: i32) -> (i32, i32) {
    %c0_i32 = arith.constant 0 : i32
    %c0_i32_0 = arith.constant 0 : i32
    %c0_i32_1 = arith.constant 0 : i32
    return %c0_i32, %c0_i32_0 : i32, i32
  }
  func.func @transform_2(%arg0: i32) -> (i32, i32) {
    %c0_i32 = arith.constant 0 : i32
    %c0_i32_0 = arith.constant 0 : i32
    %c0_i32_1 = arith.constant 0 : i32
    return %c0_i32, %c0_i32_0 : i32, i32
  }
  func.func @transform_3(%arg0: i32) -> (i32, i32) {
    %c0_i32 = arith.constant 0 : i32
    %c0_i32_0 = arith.constant 0 : i32
    %c0_i32_1 = arith.constant 0 : i32
    return %c0_i32, %c0_i32_0 : i32, i32
  }
  func.func @transform_4(%arg0: i32) -> (i32, i32) {
    %c0_i32 = arith.constant 0 : i32
    %c0_i32_0 = arith.constant 0 : i32
    %c0_i32_1 = arith.constant 0 : i32
    return %c0_i32, %c0_i32_0 : i32, i32
  }
  func.func @transform_5(%arg0: i32) -> (i32, i32) {
    %c0_i32 = arith.constant 0 : i32
    %c0_i32_0 = arith.constant 0 : i32
    %c0_i32_1 = arith.constant 0 : i32
    return %c0_i32, %c0_i32_0 : i32, i32
  }
  func.func @transform_6(%arg0: i32) -> (i32, i32) {
    %c0_i32 = arith.constant 0 : i32
    %c0_i32_0 = arith.constant 0 : i32
    %c0_i32_1 = arith.constant 0 : i32
    return %c0_i32, %c0_i32_0 : i32, i32
  }
  func.func @transform_7(%arg0: i32) -> (i32, i32) {
    %c0_i32 = arith.constant 0 : i32
    %c0_i32_0 = arith.constant 0 : i32
    %c0_i32_1 = arith.constant 0 : i32
    return %c0_i32, %c0_i32_0 : i32, i32
  }
  func.func @transform_8(%arg0: i32) -> (i32, i32) {
    %c0_i32 = arith.constant 0 : i32
    %c0_i32_0 = arith.constant 0 : i32
    %c0_i32_1 = arith.constant 0 : i32
    return %c0_i32, %c0_i32_0 : i32, i32
  }
  func.func @transform_9(%arg0: i32) -> (i32, i32) {
    %c0_i32 = arith.constant 0 : i32
    %c0_i32_0 = arith.constant 0 : i32
    return %arg0, %c0_i32 : i32, i32
  }
}

</mosaic_0001>

<llo_original>
// kernel: _forward_impl.1
$region0: #{_forward_impl.1}
  #allocation0 [shape = 'u32[]', space=smem, size = 0x4, offset = 0x4, fixed_abs, tag = 'smem constant byte address 0x4 - core index']
  #allocation1 [shape = 'u32[144,128]{1,0:T(1,128)}', space=vmem, size = 0x12000, scoped, tag = 'internal scratch']
  %s0 = inlined_call_operand.hbm [shape: f32[16,32], index: 0, kind: input, shape index: {}]
  %s1 = inlined_call_operand.hbm [shape: f32[32,256], index: 1, kind: input, shape index: {}]
  %s2 = inlined_call_operand.vmem [shape: f32[1,256], index: 2, kind: input, shape index: {}]
  %s3 = inlined_call_operand.hbm [shape: f32[128,256], index: 3, kind: input, shape index: {}]
  %s4 = inlined_call_operand.vmem [shape: f32[1,256], index: 4, kind: input, shape index: {}]
  %s5 = inlined_call_operand.hbm [shape: f32[128,256], index: 5, kind: input, shape index: {}]
  %s6 = inlined_call_operand.vmem [shape: f32[1,256], index: 6, kind: input, shape index: {}]
  %s7 = inlined_call_operand.hbm [shape: f32[128,128], index: 7, kind: input, shape index: {}]
  %s8 = inlined_call_operand.vmem [shape: f32[1,128], index: 8, kind: input, shape index: {}]
  %s9 = inlined_call_operand.vmem [shape: f32[16,128], index: 9, kind: output, shape index: {}]
  %s10 = sld [smem:[#allocation0]]
  $region66: #{_forward_impl.1} parent=0
    _
  %s12 = ssub.s32 1, %s10
  %s13 = scalar_select 0, %s12, %s10
  $region1: #{_forward_impl.1} parent=0
    #allocation2 [shape = 'u8[8192]{0}', space=vmem, size = 0x2000, scoped, tag = 'input window, operand 0, single buffered']
    #allocation3 [shape = 's32[1]{0}', space=sflag, size = 0x4, scoped, tag = 'scoped memory for _forward_impl.1']
    #allocation4 [shape = 'u8[32768]{0}', space=vmem, size = 0x8000, scoped, tag = 'input window, operand 1, single buffered']
    #allocation5 [shape = 's32[1]{0}', space=sflag, size = 0x4, scoped, tag = 'scoped memory for _forward_impl.1']
    #allocation6 [shape = 'u8[131072]{0}', space=vmem, size = 0x20000, scoped, tag = 'input window, operand 3, single buffered']
    #allocation7 [shape = 'u8[131072]{0}', space=vmem, size = 0x20000, scoped, tag = 'input window, operand 5, single buffered']
    #allocation8 [shape = 's32[1]{0}', space=sflag, size = 0x4, scoped, tag = 'scoped memory for _forward_impl.1']
    #allocation9 [shape = 'u8[65536]{0}', space=vmem, size = 0x10000, scoped, tag = 'input window, operand 7, single buffered']
    %14 = vsyncpa [#allocation3], 0
    %15 = vsyncpa [#allocation5], 0
    %16 = vsyncpa [#allocation8], 0
    // Predicated region
    $region2: #{_forward_impl.1} parent=1 // pred_check
      _
    $region3: #{_forward_impl.1} parent=1 // pred_check_branch
      %18 = sbr.rel (0) target = $region5
    $region4: #{_forward_impl.1} parent=1 // pred_region
      %s20 = ssub.s32 256, 256
      %21 = vsyncadd [#allocation3], %s20
      %s22 = sshll.u32 [#allocation2], 4
      %s23 = int_to_ptr.vmem [resolvable:$true] %s22
      %28 = dma.hbm_to_vmem [thread:$0]  %s0, 256, %s23, [#allocation3], 128, 128, 8
    $region5: #{_forward_impl.1} parent=1 // pred_fallthru
      _
    // Predicated region
    $region6: #{_forward_impl.1} parent=1 // pred_check
      _
    $region7: #{_forward_impl.1} parent=1 // pred_check_branch
      %30 = sbr.rel (0) target = $region9
    $region8: #{_forward_impl.1} parent=1 // pred_region
      %s32 = ssub.s32 1024, 1024
      %33 = vsyncadd [#allocation5], %s32
      %s34 = sshll.u32 [#allocation4], 4
      %s35 = int_to_ptr.vmem [resolvable:$true] %s34
      %40 = dma.hbm_to_vmem [thread:$0]  %s1, 1024, %s35, [#allocation5], 256, 256, 16
    $region9: #{_forward_impl.1} parent=1 // pred_fallthru
      _
    // Predicated region
    $region10: #{_forward_impl.1} parent=1 // pred_check
      _
    $region11: #{_forward_impl.1} parent=1 // pred_check_branch
      %42 = sbr.rel (0) target = $region13
    $region12: #{_forward_impl.1} parent=1 // pred_region
      _
    $region13: #{_forward_impl.1} parent=1 // pred_fallthru
      _
    // Predicated region
    $region14: #{_forward_impl.1} parent=1 // pred_check
      _
    $region15: #{_forward_impl.1} parent=1 // pred_check_branch
      %44 = sbr.rel (0) target = $region17
    $region16: #{_forward_impl.1} parent=1 // pred_region
      %s46 = ssub.s32 4096, 4096
      %47 = vsyncadd [#allocation5], %s46
      %s48 = sshll.u32 [#allocation6], 4
      %s49 = int_to_ptr.vmem [resolvable:$true] %s48
      %54 = dma.hbm_to_vmem [thread:$0]  %s3, 4096, %s49, [#allocation5], 256, 256, 16
    $region17: #{_forward_impl.1} parent=1 // pred_fallthru
      _
    // Predicated region
    $region18: #{_forward_impl.1} parent=1 // pred_check
      _
    $region19: #{_forward_impl.1} parent=1 // pred_check_branch
      %56 = sbr.rel (0) target = $region21
    $region20: #{_forward_impl.1} parent=1 // pred_region
      _
    $region21: #{_forward_impl.1} parent=1 // pred_fallthru
      _
    // Predicated region
    $region22: #{_forward_impl.1} parent=1 // pred_check
      _
    $region23: #{_forward_impl.1} parent=1 // pred_check_branch
      %58 = sbr.rel (0) target = $region25
    $region24: #{_forward_impl.1} parent=1 // pred_region
      %s60 = ssub.s32 4096, 4096
      %61 = vsyncadd [#allocation8], %s60
      %s62 = sshll.u32 [#allocation7], 4
      %s63 = int_to_ptr.vmem [resolvable:$true] %s62
      %68 = dma.hbm_to_vmem [thread:$0]  %s5, 4096, %s63, [#allocation8], 256, 256, 16
    $region25: #{_forward_impl.1} parent=1 // pred_fallthru
      _
    // Predicated region
    $region26: #{_forward_impl.1} parent=1 // pred_check
      _
    $region27: #{_forward_impl.1} parent=1 // pred_check_branch
      %70 = sbr.rel (0) target = $region29
    $region28: #{_forward_impl.1} parent=1 // pred_region
      _
    $region29: #{_forward_impl.1} parent=1 // pred_fallthru
      _
    // Predicated region
    $region30: #{_forward_impl.1} parent=1 // pred_check
      _
    $region31: #{_forward_impl.1} parent=1 // pred_check_branch
      %72 = sbr.rel (0) target = $region33
    $region32: #{_forward_impl.1} parent=1 // pred_region
      %s74 = ssub.s32 2048, 2048
      %75 = vsyncadd [#allocation8], %s74
      %s76 = sshll.u32 [#allocation9], 4
      %s77 = int_to_ptr.vmem [resolvable:$true] %s76
      %82 = dma.hbm_to_vmem [thread:$0]  %s7, 2048, %s77, [#allocation8], 128, 128, 8
    $region33: #{_forward_impl.1} parent=1 // pred_fallthru
      _
    // Predicated region
    $region34: #{_forward_impl.1} parent=1 // pred_check
      _
    $region35: #{_forward_impl.1} parent=1 // pred_check_branch
      %84 = sbr.rel (0) target = $region37
    $region36: #{_forward_impl.1} parent=1 // pred_region
      _
    $region37: #{_forward_impl.1} parent=1 // pred_fallthru
      _
    // Predicated region
    $region38: #{_forward_impl.1} parent=1 // pred_check
      _
    $region39: #{_forward_impl.1} parent=1 // pred_check_branch
      %86 = sbr.rel (0) target = $region41
    $region40: #{_forward_impl.1} parent=1 // pred_region
      %87 = dma.done [#allocation3], 256
    $region41: #{_forward_impl.1} parent=1 // pred_fallthru
      _
    // Predicated region
    $region42: #{_forward_impl.1} parent=1 // pred_check
      _
    $region43: #{_forward_impl.1} parent=1 // pred_check_branch
      %89 = sbr.rel (0) target = $region45
    $region44: #{_forward_impl.1} parent=1 // pred_region
      %90 = dma.done [#allocation5], 1024
    $region45: #{_forward_impl.1} parent=1 // pred_fallthru
      _
    // Predicated region
    $region46: #{_forward_impl.1} parent=1 // pred_check
      _
    $region47: #{_forward_impl.1} parent=1 // pred_check_branch
      %92 = sbr.rel (0) target = $region49
    $region48: #{_forward_impl.1} parent=1 // pred_region
      %93 = dma.done [#allocation5], 4096
    $region49: #{_forward_impl.1} parent=1 // pred_fallthru
      _
    // Predicated region
    $region50: #{_forward_impl.1} parent=1 // pred_check
      _
    $region51: #{_forward_impl.1} parent=1 // pred_check_branch
      %95 = sbr.rel (0) target = $region53
    $region52: #{_forward_impl.1} parent=1 // pred_region
      %96 = dma.done [#allocation8], 4096
    $region53: #{_forward_impl.1} parent=1 // pred_fallthru
      _
    // Predicated region
    $region54: #{_forward_impl.1} parent=1 // pred_check
      _
    $region55: #{_forward_impl.1} parent=1 // pred_check_branch
      %98 = sbr.rel (0) target = $region57
    $region56: #{_forward_impl.1} parent=1 // pred_region
      %99 = dma.done [#allocation8], 2048
    $region57: #{_forward_impl.1} parent=1 // pred_fallthru
      _
    %v100 = vld [vmem:[#allocation2] sm:$0xff]
    %v101 = vld [vmem:[#allocation2 + $0x8] sm:$0xff]
    %v102 = vld [vmem:[#allocation4] sm:$0xff]
    %v103 = vld [vmem:[#allocation4 + $0x8] sm:$0xff]
    %v104 = vld [vmem:[#allocation4 + $0x10] sm:$0xff]
    %v105 = vld [vmem:[#allocation4 + $0x18] sm:$0xff]
    %v106 = vld [vmem:[#allocation4 + $0x20] sm:$0xff]
    %v107 = vld [vmem:[#allocation4 + $0x28] sm:$0xff]
    %v108 = vld [vmem:[#allocation4 + $0x30] sm:$0xff]
    %v109 = vld [vmem:[#allocation4 + $0x38] sm:$0xff]
    %v110 = vld [vmem:[%s2] sm:$0x3]
    %v112 = vlaneseq
    %v113 = vshrl.u32 %v112, 7
    %v114 = vsub.s32 0, %v113
    %v115 = vrot.slane %v110, %v114
    %v116 = vlaneseq
    %v117 = vshrl.u32 %v116, 7
    %v118 = vsub.s32 1, %v117
    %v119 = vrot.slane %v110, %v118
    %vm122 = vcmask 261120
    %v124 = vsel %vm122, %v100, 0
    %v127 = vsel %vm122, %v101, 0
    %129 = vmatprep.subr.mxu0 0.0
    %130 = vmatpush1.msra.mxu0 0.0
    %131 = vmatprep.subr.mxu0 0.0
    %132 = vmatpush1.msra.mxu0 0.0
    %133 = vmatprep.subr.mxu0 0.0
    %134 = vmatpush1.msra.mxu0 0.0
    %135 = vmatprep.subr.mxu0 0.0
    %136 = vmatpush1.msra.mxu0 0.0
    %137 = vmatprep.subr.mxu0 0.0
    %138 = vmatpush1.msra.mxu0 0.0
    %139 = vmatprep.subr.mxu0 0.0
    %140 = vmatpush1.msra.mxu0 0.0
    %141 = vmatprep.subr.mxu0 0.0
    %142 = vmatpush1.msra.mxu0 0.0
    %143 = vmatprep.subr.mxu0 0.0
    %144 = vmatpush1.msra.mxu0 0.0
    %145 = vmatprep.subr.mxu0 0.0
    %146 = vmatpush1.msra.mxu0 0.0
    %147 = vmatprep.subr.mxu0 0.0
    %148 = vmatpush1.msra.mxu0 0.0
    %149 = vmatprep.subr.mxu0 0.0
    %150 = vmatpush1.msra.mxu0 0.0
    %151 = vmatprep.subr.mxu0 0.0
    %152 = vmatpush1.msra.mxu0 0.0
    %153 = vmatprep.subr.mxu0 %v109
    %154 = vmatpush1.msra.mxu0 %v108
    %155 = vmatprep.subr.mxu0 %v107
    %156 = vmatpush1.msra.mxu0 %v106
    %157 = vmatprep.subr.mxu0 %v105
    %158 = vmatpush1.msra.mxu0 %v104
    %159 = vmatprep.subr.mxu0 %v103
    %160 = vmatpush1.msra.mxu0 %v102
    %161 = vmatprep.subr.mxu0 0.0
    %162 = vmatpush2.msra.mxu0 0.0
    %163 = vmatprep.subr.mxu0 0.0
    %164 = vmatpush2.msra.mxu0 0.0
    %165 = vmatprep.subr.mxu0 0.0
    %166 = vmatpush2.msra.mxu0 0.0
    %167 = vmatprep.subr.mxu0 0.0
    %168 = vmatpush2.msra.mxu0 0.0
    %169 = vmatprep.subr.mxu0 0.0
    %170 = vmatpush2.msra.mxu0 0.0
    %171 = vmatprep.subr.mxu0 0.0
    %172 = vmatpush2.msra.mxu0 0.0
    %173 = vmatprep.subr.mxu0 0.0
    %174 = vmatpush2.msra.mxu0 0.0
    %175 = vmatprep.subr.mxu0 0.0
    %176 = vmatpush2.msra.mxu0 0.0
    %177 = vmatprep.subr.mxu0 0.0
    %178 = vmatpush2.msra.mxu0 0.0
    %179 = vmatprep.subr.mxu0 0.0
    %180 = vmatpush2.msra.mxu0 0.0
    %181 = vmatprep.subr.mxu0 0.0
    %182 = vmatpush2.msra.mxu0 0.0
    %183 = vmatprep.subr.mxu0 0.0
    %184 = vmatpush2.msra.mxu0 0.0
    %185 = vmatprep.subr.mxu0 0.0
    %186 = vmatpush2.msra.mxu0 0.0
    %187 = vmatprep.subr.mxu0 0.0
    %188 = vmatpush2.msra.mxu0 0.0
    %189 = vmatprep.subr.mxu0 0.0
    %190 = vmatpush2.msra.mxu0 0.0
    %191 = vmatprep.subr.mxu0 0.0
    %192 = vmatpush2.msra.mxu0 0.0
    %193 = vmatprep.mubr.f32.mxu0 0.0
    %194 = vmatmul.mubr.f32.gmra.mxu0 %v124
    %v195 = vpop.f32.mrf.mxu0
    %v196 = vadd.f32 %v115, %v195
    %v197 = vpop.f32.mrf.mxu0
    %v198 = vadd.f32 %v119, %v197
    %199 = vmatprep.mubr.f32.mxu0 0.0
    %200 = vmatmul.mubr.f32.gmra.mxu0 %v127
    %v201 = vpop.f32.mrf.mxu0
    %v202 = vadd.f32 %v115, %v201
    %v203 = vpop.f32.mrf.mxu0
    %v204 = vadd.f32 %v119, %v203
    %205 = vdwg.mxu0
    %v206 = vxor.u32 %v196, 2147483648
    %v207 = vxor.u32 %v202, 2147483648
    %v208 = vmul.f32 %v206, 1.442695
    %v209 = vpow.pop %v208
    %v210 = vmul.f32 %v207, 1.442695
    %v211 = vpow.pop %v210
    %v212 = vadd.f32 %v209, 1.0
    %v213 = vadd.f32 %v211, 1.0
    %v214 = vrcp.pop %v212
    %v215 = vmul.f32 1.0, %v214
    %v216 = vrcp.pop %v213
    %v217 = vmul.f32 1.0, %v216
    %v218 = vmul.f32 %v215, %v198
    %v219 = vmul.f32 %v217, %v204
    %v220 = vld [vmem:[#allocation6] sm:$0xff]
    %v221 = vld [vmem:[#allocation6 + $0x8] sm:$0xff]
    %v222 = vld [vmem:[#allocation6 + $0x10] sm:$0xff]
    %v223 = vld [vmem:[#allocation6 + $0x18] sm:$0xff]
    %v224 = vld [vmem:[#allocation6 + $0x20] sm:$0xff]
    %v225 = vld [vmem:[#allocation6 + $0x28] sm:$0xff]
    %v226 = vld [vmem:[#allocation6 + $0x30] sm:$0xff]
    %v227 = vld [vmem:[#allocation6 + $0x38] sm:$0xff]
    %v228 = vld [vmem:[#allocation6 + $0x40] sm:$0xff]
    %v229 = vld [vmem:[#allocation6 + $0x48] sm:$0xff]
    %v230 = vld [vmem:[#allocation6 + $0x50] sm:$0xff]
    %v231 = vld [vmem:[#allocation6 + $0x58] sm:$0xff]
    %v232 = vld [vmem:[#allocation6 + $0x60] sm:$0xff]
    %v233 = vld [vmem:[#allocation6 + $0x68] sm:$0xff]
    %v234 = vld [vmem:[#allocation6 + $0x70] sm:$0xff]
    %v235 = vld [vmem:[#allocation6 + $0x78] sm:$0xff]
    %v236 = vld [vmem:[#allocation6 + $0x80] sm:$0xff]
    %v237 = vld [vmem:[#allocation6 + $0x88] sm:$0xff]
    %v238 = vld [vmem:[#allocation6 + $0x90] sm:$0xff]
    %v239 = vld [vmem:[#allocation6 + $0x98] sm:$0xff]
    %v240 = vld [vmem:[#allocation6 + $0xa0] sm:$0xff]
    %v241 = vld [vmem:[#allocation6 + $0xa8] sm:$0xff]
    %v242 = vld [vmem:[#allocation6 + $0xb0] sm:$0xff]
    %v243 = vld [vmem:[#allocation6 + $0xb8] sm:$0xff]
    %v244 = vld [vmem:[#allocation6 + $0xc0] sm:$0xff]
    %v245 = vld [vmem:[#allocation6 + $0xc8] sm:$0xff]
    %v246 = vld [vmem:[#allocation6 + $0xd0] sm:$0xff]
    %v247 = vld [vmem:[#allocation6 + $0xd8] sm:$0xff]
    %v248 = vld [vmem:[#allocation6 + $0xe0] sm:$0xff]
    %v249 = vld [vmem:[#allocation6 + $0xe8] sm:$0xff]
    %v250 = vld [vmem:[#allocation6 + $0xf0] sm:$0xff]
    %v251 = vld [vmem:[#allocation6 + $0xf8] sm:$0xff]
    %v252 = vld [vmem:[%s4] sm:$0x3]
    %v254 = vlaneseq
    %v255 = vshrl.u32 %v254, 7
    %v256 = vsub.s32 0, %v255
    %v257 = vrot.slane %v252, %v256
    %v258 = vlaneseq
    %v259 = vshrl.u32 %v258, 7
    %v260 = vsub.s32 1, %v259
    %v261 = vrot.slane %v252, %v260
    %264 = vmatprep.subr.mxu0 %v251
    %265 = vmatpush1.msra.mxu0 %v250
    %266 = vmatprep.subr.mxu0 %v249
    %267 = vmatpush1.msra.mxu0 %v248
    %268 = vmatprep.subr.mxu0 %v247
    %269 = vmatpush1.msra.mxu0 %v246
    %270 = vmatprep.subr.mxu0 %v245
    %271 = vmatpush1.msra.mxu0 %v244
    %272 = vmatprep.subr.mxu0 %v243
    %273 = vmatpush1.msra.mxu0 %v242
    %274 = vmatprep.subr.mxu0 %v241
    %275 = vmatpush1.msra.mxu0 %v240
    %276 = vmatprep.subr.mxu0 %v239
    %277 = vmatpush1.msra.mxu0 %v238
    %278 = vmatprep.subr.mxu0 %v237
    %279 = vmatpush1.msra.mxu0 %v236
    %280 = vmatprep.subr.mxu0 %v235
    %281 = vmatpush1.msra.mxu0 %v234
    %282 = vmatprep.subr.mxu0 %v233
    %283 = vmatpush1.msra.mxu0 %v232
    %284 = vmatprep.subr.mxu0 %v231
    %285 = vmatpush1.msra.mxu0 %v230
    %286 = vmatprep.subr.mxu0 %v229
    %287 = vmatpush1.msra.mxu0 %v228
    %288 = vmatprep.subr.mxu0 %v227
    %289 = vmatpush1.msra.mxu0 %v226
    %290 = vmatprep.subr.mxu0 %v225
    %291 = vmatpush1.msra.mxu0 %v224
    %292 = vmatprep.subr.mxu0 %v223
    %293 = vmatpush1.msra.mxu0 %v222
    %294 = vmatprep.subr.mxu0 %v221
    %295 = vmatpush1.msra.mxu0 %v220
    %296 = vmatprep.subr.mxu0 0.0
    %297 = vmatpush2.msra.mxu0 0.0
    %298 = vmatprep.subr.mxu0 0.0
    %299 = vmatpush2.msra.mxu0 0.0
    %300 = vmatprep.subr.mxu0 0.0
    %301 = vmatpush2.msra.mxu0 0.0
    %302 = vmatprep.subr.mxu0 0.0
    %303 = vmatpush2.msra.mxu0 0.0
    %304 = vmatprep.subr.mxu0 0.0
    %305 = vmatpush2.msra.mxu0 0.0
    %306 = vmatprep.subr.mxu0 0.0
    %307 = vmatpush2.msra.mxu0 0.0
    %308 = vmatprep.subr.mxu0 0.0
    %309 = vmatpush2.msra.mxu0 0.0
    %310 = vmatprep.subr.mxu0 0.0
    %311 = vmatpush2.msra.mxu0 0.0
    %312 = vmatprep.subr.mxu0 0.0
    %313 = vmatpush2.msra.mxu0 0.0
    %314 = vmatprep.subr.mxu0 0.0
    %315 = vmatpush2.msra.mxu0 0.0
    %316 = vmatprep.subr.mxu0 0.0
    %317 = vmatpush2.msra.mxu0 0.0
    %318 = vmatprep.subr.mxu0 0.0
    %319 = vmatpush2.msra.mxu0 0.0
    %320 = vmatprep.subr.mxu0 0.0
    %321 = vmatpush2.msra.mxu0 0.0
    %322 = vmatprep.subr.mxu0 0.0
    %323 = vmatpush2.msra.mxu0 0.0
    %324 = vmatprep.subr.mxu0 0.0
    %325 = vmatpush2.msra.mxu0 0.0
    %326 = vmatprep.subr.mxu0 0.0
    %327 = vmatpush2.msra.mxu0 0.0
    %328 = vmatprep.mubr.f32.mxu0 0.0
    %329 = vmatmul.mubr.f32.gmra.mxu0 %v218
    %v330 = vpop.f32.mrf.mxu0
    %v331 = vadd.f32 %v257, %v330
    %v332 = vpop.f32.mrf.mxu0
    %v333 = vadd.f32 %v261, %v332
    %334 = vmatprep.mubr.f32.mxu0 0.0
    %335 = vmatmul.mubr.f32.gmra.mxu0 %v219
    %v336 = vpop.f32.mrf.mxu0
    %v337 = vadd.f32 %v257, %v336
    %v338 = vpop.f32.mrf.mxu0
    %v339 = vadd.f32 %v261, %v338
    %340 = vdwg.mxu0
    %v341 = vxor.u32 %v331, 2147483648
    %v342 = vxor.u32 %v337, 2147483648
    %v343 = vmul.f32 %v341, 1.442695
    %v344 = vpow.pop %v343
    %v345 = vmul.f32 %v342, 1.442695
    %v346 = vpow.pop %v345
    %v347 = vadd.f32 %v344, 1.0
    %v348 = vadd.f32 %v346, 1.0
    %v349 = vrcp.pop %v347
    %v350 = vmul.f32 1.0, %v349
    %v351 = vrcp.pop %v348
    %v352 = vmul.f32 1.0, %v351
    %v353 = vmul.f32 %v350, %v333
    %v354 = vmul.f32 %v352, %v339
    %v355 = vld [vmem:[#allocation7] sm:$0xff]
    %v356 = vld [vmem:[#allocation7 + $0x8] sm:$0xff]
    %v357 = vld [vmem:[#allocation7 + $0x10] sm:$0xff]
    %v358 = vld [vmem:[#allocation7 + $0x18] sm:$0xff]
    %v359 = vld [vmem:[#allocation7 + $0x20] sm:$0xff]
    %v360 = vld [vmem:[#allocation7 + $0x28] sm:$0xff]
    %v361 = vld [vmem:[#allocation7 + $0x30] sm:$0xff]
    %v362 = vld [vmem:[#allocation7 + $0x38] sm:$0xff]
    %v363 = vld [vmem:[#allocation7 + $0x40] sm:$0xff]
    %v364 = vld [vmem:[#allocation7 + $0x48] sm:$0xff]
    %v365 = vld [vmem:[#allocation7 + $0x50] sm:$0xff]
    %v366 = vld [vmem:[#allocation7 + $0x58] sm:$0xff]
    %v367 = vld [vmem:[#allocation7 + $0x60] sm:$0xff]
    %v368 = vld [vmem:[#allocation7 + $0x68] sm:$0xff]
    %v369 = vld [vmem:[#allocation7 + $0x70] sm:$0xff]
    %v370 = vld [vmem:[#allocation7 + $0x78] sm:$0xff]
    %v371 = vld [vmem:[#allocation7 + $0x80] sm:$0xff]
    %v372 = vld [vmem:[#allocation7 + $0x88] sm:$0xff]
    %v373 = vld [vmem:[#allocation7 + $0x90] sm:$0xff]
    %v374 = vld [vmem:[#allocation7 + $0x98] sm:$0xff]
    %v375 = vld [vmem:[#allocation7 + $0xa0] sm:$0xff]
    %v376 = vld [vmem:[#allocation7 + $0xa8] sm:$0xff]
    %v377 = vld [vmem:[#allocation7 + $0xb0] sm:$0xff]
    %v378 = vld [vmem:[#allocation7 + $0xb8] sm:$0xff]
    %v379 = vld [vmem:[#allocation7 + $0xc0] sm:$0xff]
    %v380 = vld [vmem:[#allocation7 + $0xc8] sm:$0xff]
    %v381 = vld [vmem:[#allocation7 + $0xd0] sm:$0xff]
    %v382 = vld [vmem:[#allocation7 + $0xd8] sm:$0xff]
    %v383 = vld [vmem:[#allocation7 + $0xe0] sm:$0xff]
    %v384 = vld [vmem:[#allocation7 + $0xe8] sm:$0xff]
    %v385 = vld [vmem:[#allocation7 + $0xf0] sm:$0xff]
    %v386 = vld [vmem:[#allocation7 + $0xf8] sm:$0xff]
    %v387 = vld [vmem:[%s6] sm:$0x3]
    %v389 = vlaneseq
    %v390 = vshrl.u32 %v389, 7
    %v391 = vsub.s32 0, %v390
    %v392 = vrot.slane %v387, %v391
    %v393 = vlaneseq
    %v394 = vshrl.u32 %v393, 7
    %v395 = vsub.s32 1, %v394
    %v396 = vrot.slane %v387, %v395
    %399 = vmatprep.subr.mxu0 %v386
    %400 = vmatpush1.msra.mxu0 %v385
    %401 = vmatprep.subr.mxu0 %v384
    %402 = vmatpush1.msra.mxu0 %v383
    %403 = vmatprep.subr.mxu0 %v382
    %404 = vmatpush1.msra.mxu0 %v381
    %405 = vmatprep.subr.mxu0 %v380
    %406 = vmatpush1.msra.mxu0 %v379
    %407 = vmatprep.subr.mxu0 %v378
    %408 = vmatpush1.msra.mxu0 %v377
    %409 = vmatprep.subr.mxu0 %v376
    %410 = vmatpush1.msra.mxu0 %v375
    %411 = vmatprep.subr.mxu0 %v374
    %412 = vmatpush1.msra.mxu0 %v373
    %413 = vmatprep.subr.mxu0 %v372
    %414 = vmatpush1.msra.mxu0 %v371
    %415 = vmatprep.subr.mxu0 %v370
    %416 = vmatpush1.msra.mxu0 %v369
    %417 = vmatprep.subr.mxu0 %v368
    %418 = vmatpush1.msra.mxu0 %v367
    %419 = vmatprep.subr.mxu0 %v366
    %420 = vmatpush1.msra.mxu0 %v365
    %421 = vmatprep.subr.mxu0 %v364
    %422 = vmatpush1.msra.mxu0 %v363
    %423 = vmatprep.subr.mxu0 %v362
    %424 = vmatpush1.msra.mxu0 %v361
    %425 = vmatprep.subr.mxu0 %v360
    %426 = vmatpush1.msra.mxu0 %v359
    %427 = vmatprep.subr.mxu0 %v358
    %428 = vmatpush1.msra.mxu0 %v357
    %429 = vmatprep.subr.mxu0 %v356
    %430 = vmatpush1.msra.mxu0 %v355
    %431 = vmatprep.subr.mxu0 0.0
    %432 = vmatpush2.msra.mxu0 0.0
    %433 = vmatprep.subr.mxu0 0.0
    %434 = vmatpush2.msra.mxu0 0.0
    %435 = vmatprep.subr.mxu0 0.0
    %436 = vmatpush2.msra.mxu0 0.0
    %437 = vmatprep.subr.mxu0 0.0
    %438 = vmatpush2.msra.mxu0 0.0
    %439 = vmatprep.subr.mxu0 0.0
    %440 = vmatpush2.msra.mxu0 0.0
    %441 = vmatprep.subr.mxu0 0.0
    %442 = vmatpush2.msra.mxu0 0.0
    %443 = vmatprep.subr.mxu0 0.0
    %444 = vmatpush2.msra.mxu0 0.0
    %445 = vmatprep.subr.mxu0 0.0
    %446 = vmatpush2.msra.mxu0 0.0
    %447 = vmatprep.subr.mxu0 0.0
    %448 = vmatpush2.msra.mxu0 0.0
    %449 = vmatprep.subr.mxu0 0.0
    %450 = vmatpush2.msra.mxu0 0.0
    %451 = vmatprep.subr.mxu0 0.0
    %452 = vmatpush2.msra.mxu0 0.0
    %453 = vmatprep.subr.mxu0 0.0
    %454 = vmatpush2.msra.mxu0 0.0
    %455 = vmatprep.subr.mxu0 0.0
    %456 = vmatpush2.msra.mxu0 0.0
    %457 = vmatprep.subr.mxu0 0.0
    %458 = vmatpush2.msra.mxu0 0.0
    %459 = vmatprep.subr.mxu0 0.0
    %460 = vmatpush2.msra.mxu0 0.0
    %461 = vmatprep.subr.mxu0 0.0
    %462 = vmatpush2.msra.mxu0 0.0
    %463 = vmatprep.mubr.f32.mxu0 0.0
    %464 = vmatmul.mubr.f32.gmra.mxu0 %v353
    %v465 = vpop.f32.mrf.mxu0
    %v466 = vadd.f32 %v392, %v465
    %v467 = vpop.f32.mrf.mxu0
    %v468 = vadd.f32 %v396, %v467
    %469 = vmatprep.mubr.f32.mxu0 0.0
    %470 = vmatmul.mubr.f32.gmra.mxu0 %v354
    %v471 = vpop.f32.mrf.mxu0
    %v472 = vadd.f32 %v392, %v471
    %v473 = vpop.f32.mrf.mxu0
    %v474 = vadd.f32 %v396, %v473
    %475 = vdwg.mxu0
    %v476 = vxor.u32 %v466, 2147483648
    %v477 = vxor.u32 %v472, 2147483648
    %v478 = vmul.f32 %v476, 1.442695
    %v479 = vpow.pop %v478
    %v480 = vmul.f32 %v477, 1.442695
    %v481 = vpow.pop %v480
    %v482 = vadd.f32 %v479, 1.0
    %v483 = vadd.f32 %v481, 1.0
    %v484 = vrcp.pop %v482
    %v485 = vmul.f32 1.0, %v484
    %v486 = vrcp.pop %v483
    %v487 = vmul.f32 1.0, %v486
    %v488 = vmul.f32 %v485, %v468
    %v489 = vmul.f32 %v487, %v474
    %v490 = vld [vmem:[#allocation9] sm:$0xff]
    %v491 = vld [vmem:[#allocation9 + $0x8] sm:$0xff]
    %v492 = vld [vmem:[#allocation9 + $0x10] sm:$0xff]
    %v493 = vld [vmem:[#allocation9 + $0x18] sm:$0xff]
    %v494 = vld [vmem:[#allocation9 + $0x20] sm:$0xff]
    %v495 = vld [vmem:[#allocation9 + $0x28] sm:$0xff]
    %v496 = vld [vmem:[#allocation9 + $0x30] sm:$0xff]
    %v497 = vld [vmem:[#allocation9 + $0x38] sm:$0xff]
    %v498 = vld [vmem:[#allocation9 + $0x40] sm:$0xff]
    %v499 = vld [vmem:[#allocation9 + $0x48] sm:$0xff]
    %v500 = vld [vmem:[#allocation9 + $0x50] sm:$0xff]
    %v501 = vld [vmem:[#allocation9 + $0x58] sm:$0xff]
    %v502 = vld [vmem:[#allocation9 + $0x60] sm:$0xff]
    %v503 = vld [vmem:[#allocation9 + $0x68] sm:$0xff]
    %v504 = vld [vmem:[#allocation9 + $0x70] sm:$0xff]
    %v505 = vld [vmem:[#allocation9 + $0x78] sm:$0xff]
    %v506 = vld [vmem:[%s8] sm:$0x1]
    %v508 = vlaneseq
    %v509 = vshrl.u32 %v508, 7
    %v510 = vsub.s32 0, %v509
    %v511 = vrot.slane %v506, %v510
    %513 = vmatprep.subr.mxu0 0.0
    %514 = vmatpush1.msra.mxu0 %v505
    %515 = vmatprep.subr.mxu0 0.0
    %516 = vmatpush1.msra.mxu0 %v504
    %517 = vmatprep.subr.mxu0 0.0
    %518 = vmatpush1.msra.mxu0 %v503
    %519 = vmatprep.subr.mxu0 0.0
    %520 = vmatpush1.msra.mxu0 %v502
    %521 = vmatprep.subr.mxu0 0.0
    %522 = vmatpush1.msra.mxu0 %v501
    %523 = vmatprep.subr.mxu0 0.0
    %524 = vmatpush1.msra.mxu0 %v500
    %525 = vmatprep.subr.mxu0 0.0
    %526 = vmatpush1.msra.mxu0 %v499
    %527 = vmatprep.subr.mxu0 0.0
    %528 = vmatpush1.msra.mxu0 %v498
    %529 = vmatprep.subr.mxu0 0.0
    %530 = vmatpush1.msra.mxu0 %v497
    %531 = vmatprep.subr.mxu0 0.0
    %532 = vmatpush1.msra.mxu0 %v496
    %533 = vmatprep.subr.mxu0 0.0
    %534 = vmatpush1.msra.mxu0 %v495
    %535 = vmatprep.subr.mxu0 0.0
    %536 = vmatpush1.msra.mxu0 %v494
    %537 = vmatprep.subr.mxu0 0.0
    %538 = vmatpush1.msra.mxu0 %v493
    %539 = vmatprep.subr.mxu0 0.0
    %540 = vmatpush1.msra.mxu0 %v492
    %541 = vmatprep.subr.mxu0 0.0
    %542 = vmatpush1.msra.mxu0 %v491
    %543 = vmatprep.subr.mxu0 0.0
    %544 = vmatpush1.msra.mxu0 %v490
    %545 = vmatprep.subr.mxu0 0.0
    %546 = vmatpush2.msra.mxu0 0.0
    %547 = vmatprep.subr.mxu0 0.0
    %548 = vmatpush2.msra.mxu0 0.0
    %549 = vmatprep.subr.mxu0 0.0
    %550 = vmatpush2.msra.mxu0 0.0
    %551 = vmatprep.subr.mxu0 0.0
    %552 = vmatpush2.msra.mxu0 0.0
    %553 = vmatprep.subr.mxu0 0.0
    %554 = vmatpush2.msra.mxu0 0.0
    %555 = vmatprep.subr.mxu0 0.0
    %556 = vmatpush2.msra.mxu0 0.0
    %557 = vmatprep.subr.mxu0 0.0
    %558 = vmatpush2.msra.mxu0 0.0
    %559 = vmatprep.subr.mxu0 0.0
    %560 = vmatpush2.msra.mxu0 0.0
    %561 = vmatprep.subr.mxu0 0.0
    %562 = vmatpush2.msra.mxu0 0.0
    %563 = vmatprep.subr.mxu0 0.0
    %564 = vmatpush2.msra.mxu0 0.0
    %565 = vmatprep.subr.mxu0 0.0
    %566 = vmatpush2.msra.mxu0 0.0
    %567 = vmatprep.subr.mxu0 0.0
    %568 = vmatpush2.msra.mxu0 0.0
    %569 = vmatprep.subr.mxu0 0.0
    %570 = vmatpush2.msra.mxu0 0.0
    %571 = vmatprep.subr.mxu0 0.0
    %572 = vmatpush2.msra.mxu0 0.0
    %573 = vmatprep.subr.mxu0 0.0
    %574 = vmatpush2.msra.mxu0 0.0
    %575 = vmatprep.subr.mxu0 0.0
    %576 = vmatpush2.msra.mxu0 0.0
    %577 = vmatprep.mubr.f32.mxu0 0.0
    %578 = vmatmul.mubr.f32.gmra.mxu0 %v488
    %v579 = vpop.f32.mrf.mxu0
    %v580 = vadd.f32 %v511, %v579
    %v581 = vpop.f32.mrf.mxu0
    %582 = vmatprep.mubr.f32.mxu0 0.0
    %583 = vmatmul.mubr.f32.gmra.mxu0 %v489
    %v584 = vpop.f32.mrf.mxu0
    %v585 = vadd.f32 %v511, %v584
    %v586 = vpop.f32.mrf.mxu0
    %587 = vdwg.mxu0
    %588 = vst [vmem:[%s9] sm:$0xff] %v580
    %589 = vst [vmem:[%s9 + $0x8] sm:$0xff] %v585
    // Predicated region
    $region58: #{_forward_impl.1} parent=1 // pred_check
      _
    $region59: #{_forward_impl.1} parent=1 // pred_check_branch
      %591 = sbr.rel (0) target = $region61
    $region60: #{_forward_impl.1} parent=1 // pred_region
      _
    $region61: #{_forward_impl.1} parent=1 // pred_fallthru
      _
    // Predicated region
    $region62: #{_forward_impl.1} parent=1 // pred_check
      _
    $region63: #{_forward_impl.1} parent=1 // pred_check_branch
      %593 = sbr.rel (0) target = $region65
    $region64: #{_forward_impl.1} parent=1 // pred_region
      _
    $region65: #{_forward_impl.1} parent=1 // pred_fallthru
      _
    %594 = vsyncpa [#allocation3], 1
    %595 = vsyncpa [#allocation5], 1
    %596 = vsyncpa [#allocation8], 1

</llo_original>
